<compile_context>
chip_gen: v6e
topology: v6e:2x2x1
jax: 0.10.0
libtpu: 0.0.40
codegen_flags: <defaults>
</compile_context>

<pallas_src>
import jax
import jax.numpy as jnp
from jax.experimental import pallas as pl
from jax.experimental.pallas import tpu as pltpu


def _round_up(n, m):
    return ((n + m - 1) // m) * m


# ---------------------------------------------------------------------------
# Kernel body: one batch tile per grid step; weights stay VMEM-resident.
# ---------------------------------------------------------------------------
def shallow_kernel(x_ref, w1_ref, b1_ref, w2_ref, b2_ref, o_ref):
    # hidden layer: MXU matmul with f32 accumulation; bias + ReLU in f32
    # (safe on every generation -- v5e's VPU has no bf16 path).
    h = jnp.dot(x_ref[...], w1_ref[...], preferred_element_type=jnp.float32)
    h = jnp.maximum(h + b1_ref[...], 0.0)
    # single cast of the activations to the weight dtype so the second matmul
    # also takes the fast MXU operand path; accumulation stays f32.
    o = jnp.dot(h.astype(w2_ref.dtype), w2_ref[...],
                preferred_element_type=jnp.float32)
    o_ref[...] = (o + b2_ref[...]).astype(o_ref.dtype)


# ---------------------------------------------------------------------------
# Generation-aware VMEM accounting.
# ---------------------------------------------------------------------------
def _vmem_capacity_bytes():
    try:
        cap = getattr(pltpu.get_tpu_info(), "vmem_capacity_bytes", None)
        if cap:
            return int(cap)
    except Exception:
        pass
    return 64 << 20  # conservative fallback (v7x-sized)


def _vmem_estimate_bytes(tb, ip, hp, op, act_bytes, w_bytes, out_bytes,
                         x_bufs=2, out_bufs=2, weight_bufs=1):
    x_tiles = x_bufs * tb * ip * act_bytes              # pipelined x blocks
    o_tiles = out_bufs * tb * op * out_bytes            # pipelined out blocks
    weights = weight_bufs * ((ip * hp + hp * op) * w_bytes + (hp + op) * 4)
    # in-kernel temporaries: f32 h, low-precision copy of h, f32 pre-bias out
    interm = tb * hp * 4 + tb * hp * w_bytes + tb * op * 4
    mosaic_scratch = 4 << 20                             # internal scratch
    return x_tiles + o_tiles + weights + interm + mosaic_scratch


def _choose_tb(requested_tb, batch, ip, hp, op, act_bytes, w_bytes, out_bytes,
               budget_bytes):
    # >= 2 grid steps when the batch allows it, so the "parallel" axis can be
    # sharded across both v7x TensorCores (no-op on single-TC v5e/v6e).
    two_step_cap = _round_up(-(-batch // 2), 8) if batch > 8 else 8
    tb = _round_up(min(requested_tb, batch), 8)
    tb = max(8, min(tb, two_step_cap))
    while tb > 8 and _vmem_estimate_bytes(
            tb, ip, hp, op, act_bytes, w_bytes, out_bytes) > budget_bytes:
        tb = max(8, _round_up(tb // 2, 8))
    return tb


# ---------------------------------------------------------------------------
# One-time parameter preparation (pad + cast hoisted out of the hot path).
# ---------------------------------------------------------------------------
def prepare_params(w1, b1, w2, b2, *, compute_dtype=None):
    """Pad hidden/out (and large in_dim) to lane-dense multiples of 128 and
    cast weights to the matmul operand dtype ONCE.  Zero padding is a
    mathematical no-op: relu(0 + 0) = 0 and zero rows/cols contribute 0."""
    in_dim, hidden = w1.shape
    out_dim = w2.shape[1]
    b1 = jnp.asarray(b1).reshape(1, hidden)
    b2 = jnp.asarray(b2).reshape(1, out_dim)

    w_dtype = compute_dtype if compute_dtype is not None else w1.dtype
    # lane-pad in_dim only when it is already large; at tiny in_dim the block
    # equals the full array dim (legal) and padding would just inflate bytes.
    ip = in_dim if in_dim <= 128 else _round_up(in_dim, 128)
    hp = _round_up(hidden, 128)
    op = _round_up(out_dim, 128)

    w1_p = jnp.pad(w1.astype(w_dtype), ((0, ip - in_dim), (0, hp - hidden)))
    b1_p = jnp.pad(b1.astype(jnp.float32), ((0, 0), (0, hp - hidden)))
    w2_p = jnp.pad(w2.astype(w_dtype), ((0, hp - hidden), (0, op - out_dim)))
    b2_p = jnp.pad(b2.astype(jnp.float32), ((0, 0), (0, op - out_dim)))

    return dict(w1=w1_p, b1=b1_p, w2=w2_p, b2=b2_p,
                in_dim=in_dim, hidden=hidden, out_dim=out_dim,
                ip=ip, hp=hp, op=op, compute_dtype=compute_dtype)


# ---------------------------------------------------------------------------
# Forward pass.
# ---------------------------------------------------------------------------
def shallow_net_prepared(x, prepared, *, tb=512, out_dtype=None, x_buffers=2):
    B, in_dim = x.shape
    assert in_dim == prepared["in_dim"], "input feature dim mismatch"
    ip, hp, op = prepared["ip"], prepared["hp"], prepared["op"]
    compute_dtype = prepared["compute_dtype"]
    act_dtype = compute_dtype if compute_dtype is not None else x.dtype
    out_dtype = out_dtype if out_dtype is not None else x.dtype

    act_bytes = jnp.dtype(act_dtype).itemsize
    w_bytes = jnp.dtype(prepared["w1"].dtype).itemsize
    out_bytes = jnp.dtype(out_dtype).itemsize

    cap = _vmem_capacity_bytes()
    budget = int(cap * 0.65)            # ~41 MiB on v7x, ~83 MiB on v5e/v6e
    TB = _choose_tb(tb, B, ip, hp, op, act_bytes, w_bytes, out_bytes, budget)
    Bp = _round_up(B, TB)

    x_p = jnp.pad(x.astype(act_dtype), ((0, Bp - B), (0, ip - in_dim)))

    est = _vmem_estimate_bytes(TB, ip, hp, op, act_bytes, w_bytes, out_bytes,
                               x_bufs=max(2, x_buffers))
    vmem_limit = int(min(max(est + (8 << 20), 32 << 20), int(cap * 0.75)))

    def _in_specs(use_buffered):
        if use_buffered:
            x_spec = pl.BlockSpec((TB, ip), lambda i: (i, 0),
                                  pipeline_mode=pl.Buffered(x_buffers))
            w_kw = dict(pipeline_mode=pl.Buffered(1))  # fetched once; 1 buffer
        else:
            x_spec = pl.BlockSpec((TB, ip), lambda i: (i, 0))
            w_kw = {}
        return [
            x_spec,                                               # batch-tiled x
            pl.BlockSpec((ip, hp), lambda i: (0, 0), **w_kw),     # resident w1
            pl.BlockSpec((1, hp), lambda i: (0, 0), **w_kw),      # resident b1
            pl.BlockSpec((hp, op), lambda i: (0, 0), **w_kw),     # resident w2
            pl.BlockSpec((1, op), lambda i: (0, 0), **w_kw),      # resident b2
        ]

    def _run(use_buffered):
        return pl.pallas_call(
            shallow_kernel,
            out_shape=jax.ShapeDtypeStruct((Bp, op), out_dtype),
            grid_spec=pltpu.PrefetchScalarGridSpec(
                num_scalar_prefetch=0,
                grid=(Bp // TB,),
                in_specs=_in_specs(use_buffered),
                out_specs=pl.BlockSpec((TB, op), lambda i: (i, 0)),
            ),
            compiler_params=pltpu.CompilerParams(
                dimension_semantics=("parallel",),
                vmem_limit_bytes=vmem_limit),
        )(x_p, prepared["w1"], prepared["b1"], prepared["w2"], prepared["b2"])

    try:
        out_p = _run(True)
    except Exception:
        # pipeline_mode=pl.Buffered unsupported on this jax build: fall back to
        # the default (double-buffered) pipeline -- correctness unchanged.
        out_p = _run(False)

    return out_p[:B, :prepared["out_dim"]]


def shallow_net(x, w1, b1, w2, b2, *, tb=512, compute_dtype=None,
                out_dtype=None, x_buffers=2):
    """Convenience wrapper (re-pads weights per call; prefer prepare_params +
    shallow_net_prepared in a real training/inference loop)."""
    prepared = prepare_params(w1, b1, w2, b2, compute_dtype=compute_dtype)
    return shallow_net_prepared(x, prepared, tb=tb, out_dtype=out_dtype,
                                x_buffers=x_buffers)


def init_params(key, in_dim, hidden, out_dim, dtype=jnp.float32):
    """Deterministic init mimicking PyTorch nn.Linear defaults
    (uniform +/- 1/sqrt(fan_in)); weights stored transposed vs. torch."""
    k1, k2, k3, k4 = jax.random.split(key, 4)
    bound1 = 1.0 / jnp.sqrt(in_dim)
    bound2 = 1.0 / jnp.sqrt(hidden)
    w1 = jax.random.uniform(k1, (in_dim, hidden), dtype, -bound1, bound1)
    b1 = jax.random.uniform(k2, (1, hidden), dtype, -bound1, bound1)
    w2 = jax.random.uniform(k3, (hidden, out_dim), dtype, -bound2, bound2)
    b2 = jax.random.uniform(k4, (1, out_dim), dtype, -bound2, bound2)
    return w1, b1, w2, b2


if __name__ == "__main__":
    key = jax.random.PRNGKey(0)
    kx, kp, kx2 = jax.random.split(key, 3)

    batch, in_dim, hidden, out_dim = 8, 16, 32, 8
    x = jax.random.normal(kx, (batch, in_dim), jnp.float32)
    w1, b1, w2, b2 = init_params(kp, in_dim, hidden, out_dim)

    def ref_fwd(xx):
        return jnp.maximum(xx @ w1 + b1, 0.0) @ w2 + b2

    # f32 path (single grid step at the toy size).
    params_f32 = prepare_params(w1, b1, w2, b2)
    out = jax.block_until_ready(shallow_net_prepared(x, params_f32))
    assert out.shape == (batch, out_dim)
    assert jnp.allclose(out, ref_fwd(x), atol=1e-5, rtol=1e-5)

    # batch-tiled grid + padding path (grid > 1, B not a multiple of TB).
    big_batch = 300
    xb = jax.random.normal(kx2, (big_batch, in_dim), jnp.float32)
    out_big = jax.block_until_ready(shallow_net_prepared(xb, params_f32, tb=128))
    assert out_big.shape == (big_batch, out_dim)
    assert jnp.allclose(out_big, ref_fwd(xb), atol=1e-4, rtol=1e-4)

    # bf16 matmul operands (recommended on all generations; f32 accumulation
    # and f32 bias/ReLU epilogue), weights padded/cast once.
    params_bf16 = prepare_params(w1, b1, w2, b2, compute_dtype=jnp.bfloat16)
    out_bf16 = jax.block_until_ready(shallow_net_prepared(x, params_bf16))
    x16 = x.astype(jnp.bfloat16)
    h16 = jnp.maximum(jnp.dot(x16, w1.astype(jnp.bfloat16),
                              preferred_element_type=jnp.float32) + b1, 0.0)
    ref_bf16 = jnp.dot(h16.astype(jnp.bfloat16), w2.astype(jnp.bfloat16),
                       preferred_element_type=jnp.float32) + b2
    assert jnp.allclose(out_bf16, ref_bf16, atol=1e-2, rtol=1e-2)

    # bf16 output dtype (halves out double-buffer + HBM writeback).
    out_bf16_o = jax.block_until_ready(
        shallow_net_prepared(x, params_bf16, out_dtype=jnp.bfloat16))
    assert out_bf16_o.dtype == jnp.bfloat16
    assert jnp.allclose(out_bf16_o.astype(jnp.float32), ref_bf16,
                        atol=5e-2, rtol=5e-2)

    # Convenience wrapper matching the old signature.
    out_conv = jax.block_until_ready(shallow_net(x, w1, b1, w2, b2))
    assert jnp.allclose(out_conv, ref_fwd(x), atol=1e-5, rtol=1e-5)

    print("KERNEL_OK")
</pallas_src>

<mosaic_0001>
module attributes {stable_mosaic.version = 11 : i64} {
  func.func @shallow_kernel(%arg0: i32, %arg1: memref<8x16xf32, #tpu.memory_space<vmem>>, %arg2: memref<16x128xf32, #tpu.memory_space<vmem>>, %arg3: memref<1x128xf32, #tpu.memory_space<vmem>>, %arg4: memref<128x128xf32, #tpu.memory_space<vmem>>, %arg5: memref<1x128xf32, #tpu.memory_space<vmem>>, %arg6: memref<8x128xf32, #tpu.memory_space<vmem>>) attributes {dimension_semantics = [#tpu.dimension_semantics<parallel>], iteration_bounds = array<i64: 1>, scalar_prefetch = 0 : i64, scratch_operands = 0 : i64, tpu.core_type = #tpu.core_type<tc>, window_params = [{pipeline_mode = #tpu.pipeline_mode<double_buffered>, transform_indices = @transform_0, window_bounds = array<i64: 8, 16>}, {pipeline_mode = #tpu.pipeline_mode<synchronous>, transform_indices = @transform_1, window_bounds = array<i64: 16, 128>}, {pipeline_mode = #tpu.pipeline_mode<synchronous>, transform_indices = @transform_2, window_bounds = array<i64: 1, 128>}, {pipeline_mode = #tpu.pipeline_mode<synchronous>, transform_indices = @transform_3, window_bounds = array<i64: 128, 128>}, {pipeline_mode = #tpu.pipeline_mode<synchronous>, transform_indices = @transform_4, window_bounds = array<i64: 1, 128>}, {transform_indices = @transform_5, window_bounds = array<i64: 8, 128>}]} {
    %c0 = arith.constant 0 : index
    %c0_0 = arith.constant 0 : index
    %0 = vector.load %arg1[%c0, %c0_0] : memref<8x16xf32, #tpu.memory_space<vmem>>, vector<8x16xf32>
    %c0_1 = arith.constant 0 : index
    %c0_2 = arith.constant 0 : index
    %1 = vector.load %arg2[%c0_1, %c0_2] : memref<16x128xf32, #tpu.memory_space<vmem>>, vector<16x128xf32>
    %cst = arith.constant dense<0.000000e+00> : vector<8x128xf32>
    %2 = tpu.matmul %0, %1, %cst {dimension_numbers = #tpu.dot_dimension_numbers<[1], [0], [0], [1], [0, 0, 1, 1], [], []>} : vector<8x16xf32>, vector<16x128xf32>, vector<8x128xf32> -> vector<8x128xf32>
    %c0_3 = arith.constant 0 : index
    %c0_4 = arith.constant 0 : index
    %3 = vector.load %arg3[%c0_3, %c0_4] : memref<1x128xf32, #tpu.memory_space<vmem>>, vector<1x128xf32>
    %4 = vector.broadcast %3 : vector<1x128xf32> to vector<8x128xf32>
    %5 = arith.addf %2, %4 : vector<8x128xf32>
    %cst_5 = arith.constant 0.000000e+00 : f32
    %6 = vector.broadcast %cst_5 : f32 to vector<8x128xf32>
    %7 = arith.maximumf %5, %6 : vector<8x128xf32>
    %c0_6 = arith.constant 0 : index
    %c0_7 = arith.constant 0 : index
    %8 = vector.load %arg4[%c0_6, %c0_7] : memref<128x128xf32, #tpu.memory_space<vmem>>, vector<128x128xf32>
    %cst_8 = arith.constant dense<0.000000e+00> : vector<8x128xf32>
    %9 = tpu.matmul %7, %8, %cst_8 {dimension_numbers = #tpu.dot_dimension_numbers<[1], [0], [0], [1], [0, 0, 1, 1], [], []>} : vector<8x128xf32>, vector<128x128xf32>, vector<8x128xf32> -> vector<8x128xf32>
    %c0_9 = arith.constant 0 : index
    %c0_10 = arith.constant 0 : index
    %10 = vector.load %arg5[%c0_9, %c0_10] : memref<1x128xf32, #tpu.memory_space<vmem>>, vector<1x128xf32>
    %11 = vector.broadcast %10 : vector<1x128xf32> to vector<8x128xf32>
    %12 = arith.addf %9, %11 : vector<8x128xf32>
    %c0_11 = arith.constant 0 : index
    %c0_12 = arith.constant 0 : index
    %13 = vector.load %arg6[%c0_11, %c0_12] : memref<8x128xf32, #tpu.memory_space<vmem>>, vector<8x128xf32>
    tpu.vector_store %arg6[%c0_11, %c0_12], %12 {strides = array<i32>} : memref<8x128xf32, #tpu.memory_space<vmem>>, vector<8x128xf32>,
    return
  }
  func.func @transform_0(%arg0: i32) -> (i32, i32) {
    %c0_i32 = arith.constant 0 : i32
    %c0_i32_0 = arith.constant 0 : i32
    return %arg0, %c0_i32 : i32, i32
  }
  func.func @transform_1(%arg0: i32) -> (i32, i32) {
    %c0_i32 = arith.constant 0 : i32
    %c0_i32_0 = arith.constant 0 : i32
    %c0_i32_1 = arith.constant 0 : i32
    return %c0_i32, %c0_i32_0 : i32, i32
  }
  func.func @transform_2(%arg0: i32) -> (i32, i32) {
    %c0_i32 = arith.constant 0 : i32
    %c0_i32_0 = arith.constant 0 : i32
    %c0_i32_1 = arith.constant 0 : i32
    return %c0_i32, %c0_i32_0 : i32, i32
  }
  func.func @transform_3(%arg0: i32) -> (i32, i32) {
    %c0_i32 = arith.constant 0 : i32
    %c0_i32_0 = arith.constant 0 : i32
    %c0_i32_1 = arith.constant 0 : i32
    return %c0_i32, %c0_i32_0 : i32, i32
  }
  func.func @transform_4(%arg0: i32) -> (i32, i32) {
    %c0_i32 = arith.constant 0 : i32
    %c0_i32_0 = arith.constant 0 : i32
    %c0_i32_1 = arith.constant 0 : i32
    return %c0_i32, %c0_i32_0 : i32, i32
  }
  func.func @transform_5(%arg0: i32) -> (i32, i32) {
    %c0_i32 = arith.constant 0 : i32
    %c0_i32_0 = arith.constant 0 : i32
    return %arg0, %c0_i32 : i32, i32
  }
}

module attributes {stable_mosaic.version = 11 : i64} {
  func.func @shallow_kernel(%arg0: i32, %arg1: memref<8x16xf32, #tpu.memory_space<vmem>>, %arg2: memref<16x128xf32, #tpu.memory_space<vmem>>, %arg3: memref<1x128xf32, #tpu.memory_space<vmem>>, %arg4: memref<128x128xf32, #tpu.memory_space<vmem>>, %arg5: memref<1x128xf32, #tpu.memory_space<vmem>>, %arg6: memref<8x128xf32, #tpu.memory_space<vmem>>) attributes {dimension_semantics = [#tpu.dimension_semantics<parallel>], iteration_bounds = array<i64: 1>, scalar_prefetch = 0 : i64, scratch_operands = 0 : i64, tpu.core_type = #tpu.core_type<tc>, window_params = [{transform_indices = @transform_0, window_bounds = array<i64: 8, 16>}, {pipeline_mode = #tpu.pipeline_mode<synchronous>, transform_indices = @transform_1, window_bounds = array<i64: 16, 128>}, {pipeline_mode = #tpu.pipeline_mode<synchronous>, transform_indices = @transform_2, window_bounds = array<i64: 1, 128>}, {pipeline_mode = #tpu.pipeline_mode<synchronous>, transform_indices = @transform_3, window_bounds = array<i64: 128, 128>}, {pipeline_mode = #tpu.pipeline_mode<synchronous>, transform_indices = @transform_4, window_bounds = array<i64: 1, 128>}, {transform_indices = @transform_5, window_bounds = array<i64: 8, 128>}]} {
    %c0 = arith.constant 0 : index
    %c0_0 = arith.constant 0 : index
    %0 = vector.load %arg1[%c0, %c0_0] : memref<8x16xf32, #tpu.memory_space<vmem>>, vector<8x16xf32>
    %c0_1 = arith.constant 0 : index
    %c0_2 = arith.constant 0 : index
    %1 = vector.load %arg2[%c0_1, %c0_2] : memref<16x128xf32, #tpu.memory_space<vmem>>, vector<16x128xf32>
    %cst = arith.constant dense<0.000000e+00> : vector<8x128xf32>
    %2 = tpu.matmul %0, %1, %cst {dimension_numbers = #tpu.dot_dimension_numbers<[1], [0], [0], [1], [0, 0, 1, 1], [], []>} : vector<8x16xf32>, vector<16x128xf32>, vector<8x128xf32> -> vector<8x128xf32>
    %c0_3 = arith.constant 0 : index
    %c0_4 = arith.constant 0 : index
    %3 = vector.load %arg3[%c0_3, %c0_4] : memref<1x128xf32, #tpu.memory_space<vmem>>, vector<1x128xf32>
    %4 = vector.broadcast %3 : vector<1x128xf32> to vector<8x128xf32>
    %5 = arith.addf %2, %4 : vector<8x128xf32>
    %cst_5 = arith.constant 0.000000e+00 : f32
    %6 = vector.broadcast %cst_5 : f32 to vector<8x128xf32>
    %7 = arith.maximumf %5, %6 : vector<8x128xf32>
    %c0_6 = arith.constant 0 : index
    %c0_7 = arith.constant 0 : index
    %8 = vector.load %arg4[%c0_6, %c0_7] : memref<128x128xf32, #tpu.memory_space<vmem>>, vector<128x128xf32>
    %cst_8 = arith.constant dense<0.000000e+00> : vector<8x128xf32>
    %9 = tpu.matmul %7, %8, %cst_8 {dimension_numbers = #tpu.dot_dimension_numbers<[1], [0], [0], [1], [0, 0, 1, 1], [], []>} : vector<8x128xf32>, vector<128x128xf32>, vector<8x128xf32> -> vector<8x128xf32>
    %c0_9 = arith.constant 0 : index
    %c0_10 = arith.constant 0 : index
    %10 = vector.load %arg5[%c0_9, %c0_10] : memref<1x128xf32, #tpu.memory_space<vmem>>, vector<1x128xf32>
    %11 = vector.broadcast %10 : vector<1x128xf32> to vector<8x128xf32>
    %12 = arith.addf %9, %11 : vector<8x128xf32>
    %c0_11 = arith.constant 0 : index
    %c0_12 = arith.constant 0 : index
    %13 = vector.load %arg6[%c0_11, %c0_12] : memref<8x128xf32, #tpu.memory_space<vmem>>, vector<8x128xf32>
    tpu.vector_store %arg6[%c0_11, %c0_12], %12 {strides = array<i32>} : memref<8x128xf32, #tpu.memory_space<vmem>>, vector<8x128xf32>,
    return
  }
  func.func @transform_0(%arg0: i32) -> (i32, i32) {
    %c0_i32 = arith.constant 0 : i32
    %c0_i32_0 = arith.constant 0 : i32
    return %arg0, %c0_i32 : i32, i32
  }
  func.func @transform_1(%arg0: i32) -> (i32, i32) {
    %c0_i32 = arith.constant 0 : i32
    %c0_i32_0 = arith.constant 0 : i32
    %c0_i32_1 = arith.constant 0 : i32
    return %c0_i32, %c0_i32_0 : i32, i32
  }
  func.func @transform_2(%arg0: i32) -> (i32, i32) {
    %c0_i32 = arith.constant 0 : i32
    %c0_i32_0 = arith.constant 0 : i32
    %c0_i32_1 = arith.constant 0 : i32
    return %c0_i32, %c0_i32_0 : i32, i32
  }
  func.func @transform_3(%arg0: i32) -> (i32, i32) {
    %c0_i32 = arith.constant 0 : i32
    %c0_i32_0 = arith.constant 0 : i32
    %c0_i32_1 = arith.constant 0 : i32
    return %c0_i32, %c0_i32_0 : i32, i32
  }
  func.func @transform_4(%arg0: i32) -> (i32, i32) {
    %c0_i32 = arith.constant 0 : i32
    %c0_i32_0 = arith.constant 0 : i32
    %c0_i32_1 = arith.constant 0 : i32
    return %c0_i32, %c0_i32_0 : i32, i32
  }
  func.func @transform_5(%arg0: i32) -> (i32, i32) {
    %c0_i32 = arith.constant 0 : i32
    %c0_i32_0 = arith.constant 0 : i32
    return %arg0, %c0_i32 : i32, i32
  }
}

</mosaic_0001>

<llo_original>
// kernel: tpu_custom_call.1
$region0: #{tpu_custom_call.1}
  #allocation0 [shape = 'u32[]', space=smem, size = 0x4, offset = 0x4, fixed_abs, tag = 'smem constant byte address 0x4 - core index']
  #allocation1 [shape = 'u32[144,128]{1,0:T(1,128)}', space=vmem, size = 0x12000, scoped, tag = 'internal scratch']
  %s0 = inlined_call_operand.hbm [shape: f32[8,16], index: 0, kind: input, shape index: {}]
  %s1 = inlined_call_operand.hbm [shape: f32[16,128], index: 1, kind: input, shape index: {}]
  %s2 = inlined_call_operand.vmem [shape: f32[1,128], index: 2, kind: input, shape index: {}]
  %s3 = inlined_call_operand.hbm [shape: f32[128,128], index: 3, kind: input, shape index: {}]
  %s4 = inlined_call_operand.vmem [shape: f32[1,128], index: 4, kind: input, shape index: {}]
  %s5 = inlined_call_operand.hbm [shape: f32[8,128], index: 5, kind: output, shape index: {}]
  %s6 = sld [smem:[#allocation0]]
  $region42: #{tpu_custom_call.1} parent=0
    _
  %s8 = ssub.s32 1, %s6
  %s9 = scalar_select 0, %s8, %s6
  $region1: #{tpu_custom_call.1} parent=0
    #allocation2 [shape = 'u8[4096]{0}', space=vmem, size = 0x1000, scoped, tag = 'input window, operand 0, single buffered']
    #allocation3 [shape = 's32[1]{0}', space=sflag, size = 0x4, scoped, tag = 'scoped memory for tpu_custom_call.1']
    #allocation4 [shape = 's32[1]{0}', space=sflag, size = 0x4, scoped, tag = 'scoped memory for tpu_custom_call.1']
    #allocation5 [shape = 'u8[8192]{0}', space=vmem, size = 0x2000, scoped, tag = 'input window, operand 1, single buffered']
    #allocation6 [shape = 's32[1]{0}', space=sflag, size = 0x4, scoped, tag = 'scoped memory for tpu_custom_call.1']
    #allocation7 [shape = 'u8[65536]{0}', space=vmem, size = 0x10000, scoped, tag = 'input window, operand 3, single buffered']
    #allocation8 [shape = 'u8[4096]{0}', space=vmem, size = 0x1000, scoped, tag = 'output window, operand 0, single buffered']
    %10 = vsyncpa [#allocation3], 0
    %11 = vsyncpa [#allocation6], 0
    %12 = vsyncpa [#allocation4], 0
    // Predicated region
    $region2: #{tpu_custom_call.1} parent=1 // pred_check
      _
    $region3: #{tpu_custom_call.1} parent=1 // pred_check_branch
      %14 = sbr.rel (0) target = $region5
    $region4: #{tpu_custom_call.1} parent=1 // pred_region
      %s16 = ssub.s32 128, 128
      %17 = vsyncadd [#allocation3], %s16
      %s19 = sshll.u32 [#allocation2], 4
      %s20 = int_to_ptr.vmem [resolvable:$true] %s19
      %22 = dma.hbm_to_vmem [thread:$0]  %s0, 128, %s20, [#allocation3]
    $region5: #{tpu_custom_call.1} parent=1 // pred_fallthru
      _
    // Predicated region
    $region6: #{tpu_custom_call.1} parent=1 // pred_check
      _
    $region7: #{tpu_custom_call.1} parent=1 // pred_check_branch
      %24 = sbr.rel (0) target = $region9
    $region8: #{tpu_custom_call.1} parent=1 // pred_region
      %s26 = ssub.s32 256, 256
      %27 = vsyncadd [#allocation6], %s26
      %s28 = sshll.u32 [#allocation5], 4
      %s29 = int_to_ptr.vmem [resolvable:$true] %s28
      %34 = dma.hbm_to_vmem [thread:$0]  %s1, 256, %s29, [#allocation6], 128, 128, 8
    $region9: #{tpu_custom_call.1} parent=1 // pred_fallthru
      _
    // Predicated region
    $region10: #{tpu_custom_call.1} parent=1 // pred_check
      _
    $region11: #{tpu_custom_call.1} parent=1 // pred_check_branch
      %36 = sbr.rel (0) target = $region13
    $region12: #{tpu_custom_call.1} parent=1 // pred_region
      _
    $region13: #{tpu_custom_call.1} parent=1 // pred_fallthru
      _
    // Predicated region
    $region14: #{tpu_custom_call.1} parent=1 // pred_check
      _
    $region15: #{tpu_custom_call.1} parent=1 // pred_check_branch
      %38 = sbr.rel (0) target = $region17
    $region16: #{tpu_custom_call.1} parent=1 // pred_region
      %s40 = ssub.s32 2048, 2048
      %41 = vsyncadd [#allocation6], %s40
      %s42 = sshll.u32 [#allocation7], 4
      %s43 = int_to_ptr.vmem [resolvable:$true] %s42
      %48 = dma.hbm_to_vmem [thread:$0]  %s3, 2048, %s43, [#allocation6], 128, 128, 8
    $region17: #{tpu_custom_call.1} parent=1 // pred_fallthru
      _
    // Predicated region
    $region18: #{tpu_custom_call.1} parent=1 // pred_check
      _
    $region19: #{tpu_custom_call.1} parent=1 // pred_check_branch
      %50 = sbr.rel (0) target = $region21
    $region20: #{tpu_custom_call.1} parent=1 // pred_region
      _
    $region21: #{tpu_custom_call.1} parent=1 // pred_fallthru
      _
    // Predicated region
    $region22: #{tpu_custom_call.1} parent=1 // pred_check
      _
    $region23: #{tpu_custom_call.1} parent=1 // pred_check_branch
      %52 = sbr.rel (0) target = $region25
    $region24: #{tpu_custom_call.1} parent=1 // pred_region
      %53 = dma.done [#allocation3], 128
    $region25: #{tpu_custom_call.1} parent=1 // pred_fallthru
      _
    // Predicated region
    $region26: #{tpu_custom_call.1} parent=1 // pred_check
      _
    $region27: #{tpu_custom_call.1} parent=1 // pred_check_branch
      %55 = sbr.rel (0) target = $region29
    $region28: #{tpu_custom_call.1} parent=1 // pred_region
      %56 = dma.done [#allocation6], 256
    $region29: #{tpu_custom_call.1} parent=1 // pred_fallthru
      _
    // Predicated region
    $region30: #{tpu_custom_call.1} parent=1 // pred_check
      _
    $region31: #{tpu_custom_call.1} parent=1 // pred_check_branch
      %58 = sbr.rel (0) target = $region33
    $region32: #{tpu_custom_call.1} parent=1 // pred_region
      %59 = dma.done [#allocation6], 2048
    $region33: #{tpu_custom_call.1} parent=1 // pred_fallthru
      _
    %v60 = vld [vmem:[#allocation2] sm:$0xff]
    %v61 = vld [vmem:[#allocation5] sm:$0xff]
    %v62 = vld [vmem:[#allocation5 + $0x8] sm:$0xff]
    %v63 = vld [vmem:[%s2] sm:$0x1]
    %v65 = vlaneseq
    %v66 = vshrl.u32 %v65, 7
    %v67 = vsub.s32 0, %v66
    %v68 = vrot.slane %v63, %v67
    %vm70 = vcmask 130048
    %v72 = vsel %vm70, %v60, 0
    %74 = vmatprep.subr.mxu0 0.0
    %75 = vmatpush1.msra.mxu0 0.0
    %76 = vmatprep.subr.mxu0 0.0
    %77 = vmatpush1.msra.mxu0 0.0
    %78 = vmatprep.subr.mxu0 0.0
    %79 = vmatpush1.msra.mxu0 0.0
    %80 = vmatprep.subr.mxu0 0.0
    %81 = vmatpush1.msra.mxu0 0.0
    %82 = vmatprep.subr.mxu0 0.0
    %83 = vmatpush1.msra.mxu0 0.0
    %84 = vmatprep.subr.mxu0 0.0
    %85 = vmatpush1.msra.mxu0 0.0
    %86 = vmatprep.subr.mxu0 0.0
    %87 = vmatpush1.msra.mxu0 0.0
    %88 = vmatprep.subr.mxu0 0.0
    %89 = vmatpush1.msra.mxu0 0.0
    %90 = vmatprep.subr.mxu0 0.0
    %91 = vmatpush1.msra.mxu0 0.0
    %92 = vmatprep.subr.mxu0 0.0
    %93 = vmatpush1.msra.mxu0 0.0
    %94 = vmatprep.subr.mxu0 0.0
    %95 = vmatpush1.msra.mxu0 0.0
    %96 = vmatprep.subr.mxu0 0.0
    %97 = vmatpush1.msra.mxu0 0.0
    %98 = vmatprep.subr.mxu0 0.0
    %99 = vmatpush1.msra.mxu0 0.0
    %100 = vmatprep.subr.mxu0 0.0
    %101 = vmatpush1.msra.mxu0 0.0
    %102 = vmatprep.subr.mxu0 0.0
    %103 = vmatpush1.msra.mxu0 %v62
    %104 = vmatprep.subr.mxu0 0.0
    %105 = vmatpush1.msra.mxu0 %v61
    %106 = vmatprep.subr.mxu0 0.0
    %107 = vmatpush2.msra.mxu0 0.0
    %108 = vmatprep.subr.mxu0 0.0
    %109 = vmatpush2.msra.mxu0 0.0
    %110 = vmatprep.subr.mxu0 0.0
    %111 = vmatpush2.msra.mxu0 0.0
    %112 = vmatprep.subr.mxu0 0.0
    %113 = vmatpush2.msra.mxu0 0.0
    %114 = vmatprep.subr.mxu0 0.0
    %115 = vmatpush2.msra.mxu0 0.0
    %116 = vmatprep.subr.mxu0 0.0
    %117 = vmatpush2.msra.mxu0 0.0
    %118 = vmatprep.subr.mxu0 0.0
    %119 = vmatpush2.msra.mxu0 0.0
    %120 = vmatprep.subr.mxu0 0.0
    %121 = vmatpush2.msra.mxu0 0.0
    %122 = vmatprep.subr.mxu0 0.0
    %123 = vmatpush2.msra.mxu0 0.0
    %124 = vmatprep.subr.mxu0 0.0
    %125 = vmatpush2.msra.mxu0 0.0
    %126 = vmatprep.subr.mxu0 0.0
    %127 = vmatpush2.msra.mxu0 0.0
    %128 = vmatprep.subr.mxu0 0.0
    %129 = vmatpush2.msra.mxu0 0.0
    %130 = vmatprep.subr.mxu0 0.0
    %131 = vmatpush2.msra.mxu0 0.0
    %132 = vmatprep.subr.mxu0 0.0
    %133 = vmatpush2.msra.mxu0 0.0
    %134 = vmatprep.subr.mxu0 0.0
    %135 = vmatpush2.msra.mxu0 0.0
    %136 = vmatprep.subr.mxu0 0.0
    %137 = vmatpush2.msra.mxu0 0.0
    %138 = vmatprep.mubr.f32.mxu0 0.0
    %139 = vmatmul.mubr.f32.gmra.mxu0 %v72
    %v140 = vpop.f32.mrf.mxu0
    %v141 = vadd.f32 %v68, %v140
    %v142 = vpop.f32.mrf.mxu0
    %143 = vdwg.mxu0
    %v144 = vmax.f32 %v141, 0.0
    %v145 = vld [vmem:[#allocation7] sm:$0xff]
    %v146 = vld [vmem:[#allocation7 + $0x8] sm:$0xff]
    %v147 = vld [vmem:[#allocation7 + $0x10] sm:$0xff]
    %v148 = vld [vmem:[#allocation7 + $0x18] sm:$0xff]
    %v149 = vld [vmem:[#allocation7 + $0x20] sm:$0xff]
    %v150 = vld [vmem:[#allocation7 + $0x28] sm:$0xff]
    %v151 = vld [vmem:[#allocation7 + $0x30] sm:$0xff]
    %v152 = vld [vmem:[#allocation7 + $0x38] sm:$0xff]
    %v153 = vld [vmem:[#allocation7 + $0x40] sm:$0xff]
    %v154 = vld [vmem:[#allocation7 + $0x48] sm:$0xff]
    %v155 = vld [vmem:[#allocation7 + $0x50] sm:$0xff]
    %v156 = vld [vmem:[#allocation7 + $0x58] sm:$0xff]
    %v157 = vld [vmem:[#allocation7 + $0x60] sm:$0xff]
    %v158 = vld [vmem:[#allocation7 + $0x68] sm:$0xff]
    %v159 = vld [vmem:[#allocation7 + $0x70] sm:$0xff]
    %v160 = vld [vmem:[#allocation7 + $0x78] sm:$0xff]
    %v161 = vld [vmem:[%s4] sm:$0x1]
    %v163 = vlaneseq
    %v164 = vshrl.u32 %v163, 7
    %v165 = vsub.s32 0, %v164
    %v166 = vrot.slane %v161, %v165
    %168 = vmatprep.subr.mxu0 0.0
    %169 = vmatpush1.msra.mxu0 %v160
    %170 = vmatprep.subr.mxu0 0.0
    %171 = vmatpush1.msra.mxu0 %v159
    %172 = vmatprep.subr.mxu0 0.0
    %173 = vmatpush1.msra.mxu0 %v158
    %174 = vmatprep.subr.mxu0 0.0
    %175 = vmatpush1.msra.mxu0 %v157
    %176 = vmatprep.subr.mxu0 0.0
    %177 = vmatpush1.msra.mxu0 %v156
    %178 = vmatprep.subr.mxu0 0.0
    %179 = vmatpush1.msra.mxu0 %v155
    %180 = vmatprep.subr.mxu0 0.0
    %181 = vmatpush1.msra.mxu0 %v154
    %182 = vmatprep.subr.mxu0 0.0
    %183 = vmatpush1.msra.mxu0 %v153
    %184 = vmatprep.subr.mxu0 0.0
    %185 = vmatpush1.msra.mxu0 %v152
    %186 = vmatprep.subr.mxu0 0.0
    %187 = vmatpush1.msra.mxu0 %v151
    %188 = vmatprep.subr.mxu0 0.0
    %189 = vmatpush1.msra.mxu0 %v150
    %190 = vmatprep.subr.mxu0 0.0
    %191 = vmatpush1.msra.mxu0 %v149
    %192 = vmatprep.subr.mxu0 0.0
    %193 = vmatpush1.msra.mxu0 %v148
    %194 = vmatprep.subr.mxu0 0.0
    %195 = vmatpush1.msra.mxu0 %v147
    %196 = vmatprep.subr.mxu0 0.0
    %197 = vmatpush1.msra.mxu0 %v146
    %198 = vmatprep.subr.mxu0 0.0
    %199 = vmatpush1.msra.mxu0 %v145
    %200 = vmatprep.subr.mxu0 0.0
    %201 = vmatpush2.msra.mxu0 0.0
    %202 = vmatprep.subr.mxu0 0.0
    %203 = vmatpush2.msra.mxu0 0.0
    %204 = vmatprep.subr.mxu0 0.0
    %205 = vmatpush2.msra.mxu0 0.0
    %206 = vmatprep.subr.mxu0 0.0
    %207 = vmatpush2.msra.mxu0 0.0
    %208 = vmatprep.subr.mxu0 0.0
    %209 = vmatpush2.msra.mxu0 0.0
    %210 = vmatprep.subr.mxu0 0.0
    %211 = vmatpush2.msra.mxu0 0.0
    %212 = vmatprep.subr.mxu0 0.0
    %213 = vmatpush2.msra.mxu0 0.0
    %214 = vmatprep.subr.mxu0 0.0
    %215 = vmatpush2.msra.mxu0 0.0
    %216 = vmatprep.subr.mxu0 0.0
    %217 = vmatpush2.msra.mxu0 0.0
    %218 = vmatprep.subr.mxu0 0.0
    %219 = vmatpush2.msra.mxu0 0.0
    %220 = vmatprep.subr.mxu0 0.0
    %221 = vmatpush2.msra.mxu0 0.0
    %222 = vmatprep.subr.mxu0 0.0
    %223 = vmatpush2.msra.mxu0 0.0
    %224 = vmatprep.subr.mxu0 0.0
    %225 = vmatpush2.msra.mxu0 0.0
    %226 = vmatprep.subr.mxu0 0.0
    %227 = vmatpush2.msra.mxu0 0.0
    %228 = vmatprep.subr.mxu0 0.0
    %229 = vmatpush2.msra.mxu0 0.0
    %230 = vmatprep.subr.mxu0 0.0
    %231 = vmatpush2.msra.mxu0 0.0
    %232 = vmatprep.mubr.f32.mxu0 0.0
    %233 = vmatmul.mubr.f32.gmra.mxu0 %v144
    %v234 = vpop.f32.mrf.mxu0
    %v235 = vadd.f32 %v166, %v234
    %v236 = vpop.f32.mrf.mxu0
    %237 = vdwg.mxu0
    %238 = vst [vmem:[#allocation8] sm:$0xff] %v235
    // Predicated region
    $region34: #{tpu_custom_call.1} parent=1 // pred_check
      _
    $region35: #{tpu_custom_call.1} parent=1 // pred_check_branch
      %240 = sbr.rel (0) target = $region37
    $region36: #{tpu_custom_call.1} parent=1 // pred_region
      %s242 = ssub.s32 128, 128
      %243 = vsyncadd [#allocation4], %s242
      %s245 = sshll.u32 [#allocation8], 4
      %s246 = int_to_ptr.vmem [resolvable:$true] %s245
      %248 = dma.vmem_to_hbm [thread:$0]  %s246, 128, %s5, [#allocation4]
    $region37: #{tpu_custom_call.1} parent=1 // pred_fallthru
      _
    // Predicated region
    $region38: #{tpu_custom_call.1} parent=1 // pred_check
      _
    $region39: #{tpu_custom_call.1} parent=1 // pred_check_branch
      %250 = sbr.rel (0) target = $region41
    $region40: #{tpu_custom_call.1} parent=1 // pred_region
      %251 = dma.done [#allocation4], 128
    $region41: #{tpu_custom_call.1} parent=1 // pred_fallthru
      _
    %252 = vsyncpa [#allocation3], 1
    %253 = vsyncpa [#allocation6], 1
    %254 = vsyncpa [#allocation4], 1

// kernel: tpu_custom_call.1
$region0: #{tpu_custom_call.1}
  #allocation0 [shape = 'u32[]', space=smem, size = 0x4, offset = 0x4, fixed_abs, tag = 'smem constant byte address 0x4 - core index']
  #allocation1 [shape = 'u32[144,128]{1,0:T(1,128)}', space=vmem, size = 0x12000, scoped, tag = 'internal scratch']
  %s0 = inlined_call_operand.hbm [shape: f32[8,16], index: 0, kind: input, shape index: {}]
  %s1 = inlined_call_operand.hbm [shape: f32[16,128], index: 1, kind: input, shape index: {}]
  %s2 = inlined_call_operand.vmem [shape: f32[1,128], index: 2, kind: input, shape index: {}]
  %s3 = inlined_call_operand.hbm [shape: f32[128,128], index: 3, kind: input, shape index: {}]
  %s4 = inlined_call_operand.vmem [shape: f32[1,128], index: 4, kind: input, shape index: {}]
  %s5 = inlined_call_operand.hbm [shape: f32[8,128], index: 5, kind: output, shape index: {}]
  %s6 = sld [smem:[#allocation0]]
  $region42: #{tpu_custom_call.1} parent=0
    _
  %s8 = ssub.s32 1, %s6
  %s9 = scalar_select 0, %s8, %s6
  $region1: #{tpu_custom_call.1} parent=0
    #allocation2 [shape = 'u8[4096]{0}', space=vmem, size = 0x1000, scoped, tag = 'input window, operand 0, single buffered']
    #allocation3 [shape = 's32[1]{0}', space=sflag, size = 0x4, scoped, tag = 'scoped memory for tpu_custom_call.1']
    #allocation4 [shape = 's32[1]{0}', space=sflag, size = 0x4, scoped, tag = 'scoped memory for tpu_custom_call.1']
    #allocation5 [shape = 'u8[8192]{0}', space=vmem, size = 0x2000, scoped, tag = 'input window, operand 1, single buffered']
    #allocation6 [shape = 's32[1]{0}', space=sflag, size = 0x4, scoped, tag = 'scoped memory for tpu_custom_call.1']
    #allocation7 [shape = 'u8[65536]{0}', space=vmem, size = 0x10000, scoped, tag = 'input window, operand 3, single buffered']
    #allocation8 [shape = 'u8[4096]{0}', space=vmem, size = 0x1000, scoped, tag = 'output window, operand 0, single buffered']
    %10 = vsyncpa [#allocation3], 0
    %11 = vsyncpa [#allocation6], 0
    %12 = vsyncpa [#allocation4], 0
    // Predicated region
    $region2: #{tpu_custom_call.1} parent=1 // pred_check
      _
    $region3: #{tpu_custom_call.1} parent=1 // pred_check_branch
      %14 = sbr.rel (0) target = $region5
    $region4: #{tpu_custom_call.1} parent=1 // pred_region
      %s16 = ssub.s32 128, 128
      %17 = vsyncadd [#allocation3], %s16
      %s19 = sshll.u32 [#allocation2], 4
      %s20 = int_to_ptr.vmem [resolvable:$true] %s19
      %22 = dma.hbm_to_vmem [thread:$0]  %s0, 128, %s20, [#allocation3]
    $region5: #{tpu_custom_call.1} parent=1 // pred_fallthru
      _
    // Predicated region
    $region6: #{tpu_custom_call.1} parent=1 // pred_check
      _
    $region7: #{tpu_custom_call.1} parent=1 // pred_check_branch
      %24 = sbr.rel (0) target = $region9
    $region8: #{tpu_custom_call.1} parent=1 // pred_region
      %s26 = ssub.s32 256, 256
      %27 = vsyncadd [#allocation6], %s26
      %s28 = sshll.u32 [#allocation5], 4
      %s29 = int_to_ptr.vmem [resolvable:$true] %s28
      %34 = dma.hbm_to_vmem [thread:$0]  %s1, 256, %s29, [#allocation6], 128, 128, 8
    $region9: #{tpu_custom_call.1} parent=1 // pred_fallthru
      _
    // Predicated region
    $region10: #{tpu_custom_call.1} parent=1 // pred_check
      _
    $region11: #{tpu_custom_call.1} parent=1 // pred_check_branch
      %36 = sbr.rel (0) target = $region13
    $region12: #{tpu_custom_call.1} parent=1 // pred_region
      _
    $region13: #{tpu_custom_call.1} parent=1 // pred_fallthru
      _
    // Predicated region
    $region14: #{tpu_custom_call.1} parent=1 // pred_check
      _
    $region15: #{tpu_custom_call.1} parent=1 // pred_check_branch
      %38 = sbr.rel (0) target = $region17
    $region16: #{tpu_custom_call.1} parent=1 // pred_region
      %s40 = ssub.s32 2048, 2048
      %41 = vsyncadd [#allocation6], %s40
      %s42 = sshll.u32 [#allocation7], 4
      %s43 = int_to_ptr.vmem [resolvable:$true] %s42
      %48 = dma.hbm_to_vmem [thread:$0]  %s3, 2048, %s43, [#allocation6], 128, 128, 8
    $region17: #{tpu_custom_call.1} parent=1 // pred_fallthru
      _
    // Predicated region
    $region18: #{tpu_custom_call.1} parent=1 // pred_check
      _
    $region19: #{tpu_custom_call.1} parent=1 // pred_check_branch
      %50 = sbr.rel (0) target = $region21
    $region20: #{tpu_custom_call.1} parent=1 // pred_region
      _
    $region21: #{tpu_custom_call.1} parent=1 // pred_fallthru
      _
    // Predicated region
    $region22: #{tpu_custom_call.1} parent=1 // pred_check
      _
    $region23: #{tpu_custom_call.1} parent=1 // pred_check_branch
      %52 = sbr.rel (0) target = $region25
    $region24: #{tpu_custom_call.1} parent=1 // pred_region
      %53 = dma.done [#allocation3], 128
    $region25: #{tpu_custom_call.1} parent=1 // pred_fallthru
      _
    // Predicated region
    $region26: #{tpu_custom_call.1} parent=1 // pred_check
      _
    $region27: #{tpu_custom_call.1} parent=1 // pred_check_branch
      %55 = sbr.rel (0) target = $region29
    $region28: #{tpu_custom_call.1} parent=1 // pred_region
      %56 = dma.done [#allocation6], 256
    $region29: #{tpu_custom_call.1} parent=1 // pred_fallthru
      _
    // Predicated region
    $region30: #{tpu_custom_call.1} parent=1 // pred_check
      _
    $region31: #{tpu_custom_call.1} parent=1 // pred_check_branch
      %58 = sbr.rel (0) target = $region33
    $region32: #{tpu_custom_call.1} parent=1 // pred_region
      %59 = dma.done [#allocation6], 2048
    $region33: #{tpu_custom_call.1} parent=1 // pred_fallthru
      _
    %v60 = vld [vmem:[#allocation2] sm:$0xff]
    %v61 = vld [vmem:[#allocation5] sm:$0xff]
    %v62 = vld [vmem:[#allocation5 + $0x8] sm:$0xff]
    %v63 = vld [vmem:[%s2] sm:$0x1]
    %v65 = vlaneseq
    %v66 = vshrl.u32 %v65, 7
    %v67 = vsub.s32 0, %v66
    %v68 = vrot.slane %v63, %v67
    %vm70 = vcmask 130048
    %v72 = vsel %vm70, %v60, 0
    %74 = vmatprep.subr.mxu0 0.0
    %75 = vmatpush1.msra.mxu0 0.0
    %76 = vmatprep.subr.mxu0 0.0
    %77 = vmatpush1.msra.mxu0 0.0
    %78 = vmatprep.subr.mxu0 0.0
    %79 = vmatpush1.msra.mxu0 0.0
    %80 = vmatprep.subr.mxu0 0.0
    %81 = vmatpush1.msra.mxu0 0.0
    %82 = vmatprep.subr.mxu0 0.0
    %83 = vmatpush1.msra.mxu0 0.0
    %84 = vmatprep.subr.mxu0 0.0
    %85 = vmatpush1.msra.mxu0 0.0
    %86 = vmatprep.subr.mxu0 0.0
    %87 = vmatpush1.msra.mxu0 0.0
    %88 = vmatprep.subr.mxu0 0.0
    %89 = vmatpush1.msra.mxu0 0.0
    %90 = vmatprep.subr.mxu0 0.0
    %91 = vmatpush1.msra.mxu0 0.0
    %92 = vmatprep.subr.mxu0 0.0
    %93 = vmatpush1.msra.mxu0 0.0
    %94 = vmatprep.subr.mxu0 0.0
    %95 = vmatpush1.msra.mxu0 0.0
    %96 = vmatprep.subr.mxu0 0.0
    %97 = vmatpush1.msra.mxu0 0.0
    %98 = vmatprep.subr.mxu0 0.0
    %99 = vmatpush1.msra.mxu0 0.0
    %100 = vmatprep.subr.mxu0 0.0
    %101 = vmatpush1.msra.mxu0 0.0
    %102 = vmatprep.subr.mxu0 0.0
    %103 = vmatpush1.msra.mxu0 %v62
    %104 = vmatprep.subr.mxu0 0.0
    %105 = vmatpush1.msra.mxu0 %v61
    %106 = vmatprep.subr.mxu0 0.0
    %107 = vmatpush2.msra.mxu0 0.0
    %108 = vmatprep.subr.mxu0 0.0
    %109 = vmatpush2.msra.mxu0 0.0
    %110 = vmatprep.subr.mxu0 0.0
    %111 = vmatpush2.msra.mxu0 0.0
    %112 = vmatprep.subr.mxu0 0.0
    %113 = vmatpush2.msra.mxu0 0.0
    %114 = vmatprep.subr.mxu0 0.0
    %115 = vmatpush2.msra.mxu0 0.0
    %116 = vmatprep.subr.mxu0 0.0
    %117 = vmatpush2.msra.mxu0 0.0
    %118 = vmatprep.subr.mxu0 0.0
    %119 = vmatpush2.msra.mxu0 0.0
    %120 = vmatprep.subr.mxu0 0.0
    %121 = vmatpush2.msra.mxu0 0.0
    %122 = vmatprep.subr.mxu0 0.0
    %123 = vmatpush2.msra.mxu0 0.0
    %124 = vmatprep.subr.mxu0 0.0
    %125 = vmatpush2.msra.mxu0 0.0
    %126 = vmatprep.subr.mxu0 0.0
    %127 = vmatpush2.msra.mxu0 0.0
    %128 = vmatprep.subr.mxu0 0.0
    %129 = vmatpush2.msra.mxu0 0.0
    %130 = vmatprep.subr.mxu0 0.0
    %131 = vmatpush2.msra.mxu0 0.0
    %132 = vmatprep.subr.mxu0 0.0
    %133 = vmatpush2.msra.mxu0 0.0
    %134 = vmatprep.subr.mxu0 0.0
    %135 = vmatpush2.msra.mxu0 0.0
    %136 = vmatprep.subr.mxu0 0.0
    %137 = vmatpush2.msra.mxu0 0.0
    %138 = vmatprep.mubr.f32.mxu0 0.0
    %139 = vmatmul.mubr.f32.gmra.mxu0 %v72
    %v140 = vpop.f32.mrf.mxu0
    %v141 = vadd.f32 %v68, %v140
    %v142 = vpop.f32.mrf.mxu0
    %143 = vdwg.mxu0
    %v144 = vmax.f32 %v141, 0.0
    %v145 = vld [vmem:[#allocation7] sm:$0xff]
    %v146 = vld [vmem:[#allocation7 + $0x8] sm:$0xff]
    %v147 = vld [vmem:[#allocation7 + $0x10] sm:$0xff]
    %v148 = vld [vmem:[#allocation7 + $0x18] sm:$0xff]
    %v149 = vld [vmem:[#allocation7 + $0x20] sm:$0xff]
    %v150 = vld [vmem:[#allocation7 + $0x28] sm:$0xff]
    %v151 = vld [vmem:[#allocation7 + $0x30] sm:$0xff]
    %v152 = vld [vmem:[#allocation7 + $0x38] sm:$0xff]
    %v153 = vld [vmem:[#allocation7 + $0x40] sm:$0xff]
    %v154 = vld [vmem:[#allocation7 + $0x48] sm:$0xff]
    %v155 = vld [vmem:[#allocation7 + $0x50] sm:$0xff]
    %v156 = vld [vmem:[#allocation7 + $0x58] sm:$0xff]
    %v157 = vld [vmem:[#allocation7 + $0x60] sm:$0xff]
    %v158 = vld [vmem:[#allocation7 + $0x68] sm:$0xff]
    %v159 = vld [vmem:[#allocation7 + $0x70] sm:$0xff]
    %v160 = vld [vmem:[#allocation7 + $0x78] sm:$0xff]
    %v161 = vld [vmem:[%s4] sm:$0x1]
    %v163 = vlaneseq
    %v164 = vshrl.u32 %v163, 7
    %v165 = vsub.s32 0, %v164
    %v166 = vrot.slane %v161, %v165
    %168 = vmatprep.subr.mxu0 0.0
    %169 = vmatpush1.msra.mxu0 %v160
    %170 = vmatprep.subr.mxu0 0.0
    %171 = vmatpush1.msra.mxu0 %v159
    %172 = vmatprep.subr.mxu0 0.0
    %173 = vmatpush1.msra.mxu0 %v158
    %174 = vmatprep.subr.mxu0 0.0
    %175 = vmatpush1.msra.mxu0 %v157
    %176 = vmatprep.subr.mxu0 0.0
    %177 = vmatpush1.msra.mxu0 %v156
    %178 = vmatprep.subr.mxu0 0.0
    %179 = vmatpush1.msra.mxu0 %v155
    %180 = vmatprep.subr.mxu0 0.0
    %181 = vmatpush1.msra.mxu0 %v154
    %182 = vmatprep.subr.mxu0 0.0
    %183 = vmatpush1.msra.mxu0 %v153
    %184 = vmatprep.subr.mxu0 0.0
    %185 = vmatpush1.msra.mxu0 %v152
    %186 = vmatprep.subr.mxu0 0.0
    %187 = vmatpush1.msra.mxu0 %v151
    %188 = vmatprep.subr.mxu0 0.0
    %189 = vmatpush1.msra.mxu0 %v150
    %190 = vmatprep.subr.mxu0 0.0
    %191 = vmatpush1.msra.mxu0 %v149
    %192 = vmatprep.subr.mxu0 0.0
    %193 = vmatpush1.msra.mxu0 %v148
    %194 = vmatprep.subr.mxu0 0.0
    %195 = vmatpush1.msra.mxu0 %v147
    %196 = vmatprep.subr.mxu0 0.0
    %197 = vmatpush1.msra.mxu0 %v146
    %198 = vmatprep.subr.mxu0 0.0
    %199 = vmatpush1.msra.mxu0 %v145
    %200 = vmatprep.subr.mxu0 0.0
    %201 = vmatpush2.msra.mxu0 0.0
    %202 = vmatprep.subr.mxu0 0.0
    %203 = vmatpush2.msra.mxu0 0.0
    %204 = vmatprep.subr.mxu0 0.0
    %205 = vmatpush2.msra.mxu0 0.0
    %206 = vmatprep.subr.mxu0 0.0
    %207 = vmatpush2.msra.mxu0 0.0
    %208 = vmatprep.subr.mxu0 0.0
    %209 = vmatpush2.msra.mxu0 0.0
    %210 = vmatprep.subr.mxu0 0.0
    %211 = vmatpush2.msra.mxu0 0.0
    %212 = vmatprep.subr.mxu0 0.0
    %213 = vmatpush2.msra.mxu0 0.0
    %214 = vmatprep.subr.mxu0 0.0
    %215 = vmatpush2.msra.mxu0 0.0
    %216 = vmatprep.subr.mxu0 0.0
    %217 = vmatpush2.msra.mxu0 0.0
    %218 = vmatprep.subr.mxu0 0.0
    %219 = vmatpush2.msra.mxu0 0.0
    %220 = vmatprep.subr.mxu0 0.0
    %221 = vmatpush2.msra.mxu0 0.0
    %222 = vmatprep.subr.mxu0 0.0
    %223 = vmatpush2.msra.mxu0 0.0
    %224 = vmatprep.subr.mxu0 0.0
    %225 = vmatpush2.msra.mxu0 0.0
    %226 = vmatprep.subr.mxu0 0.0
    %227 = vmatpush2.msra.mxu0 0.0
    %228 = vmatprep.subr.mxu0 0.0
    %229 = vmatpush2.msra.mxu0 0.0
    %230 = vmatprep.subr.mxu0 0.0
    %231 = vmatpush2.msra.mxu0 0.0
    %232 = vmatprep.mubr.f32.mxu0 0.0
    %233 = vmatmul.mubr.f32.gmra.mxu0 %v144
    %v234 = vpop.f32.mrf.mxu0
    %v235 = vadd.f32 %v166, %v234
    %v236 = vpop.f32.mrf.mxu0
    %237 = vdwg.mxu0
    %238 = vst [vmem:[#allocation8] sm:$0xff] %v235
    // Predicated region
    $region34: #{tpu_custom_call.1} parent=1 // pred_check
      _
    $region35: #{tpu_custom_call.1} parent=1 // pred_check_branch
      %240 = sbr.rel (0) target = $region37
    $region36: #{tpu_custom_call.1} parent=1 // pred_region
      %s242 = ssub.s32 128, 128
      %243 = vsyncadd [#allocation4], %s242
      %s245 = sshll.u32 [#allocation8], 4
      %s246 = int_to_ptr.vmem [resolvable:$true] %s245
      %248 = dma.vmem_to_hbm [thread:$0]  %s246, 128, %s5, [#allocation4]
    $region37: #{tpu_custom_call.1} parent=1 // pred_fallthru
      _
    // Predicated region
    $region38: #{tpu_custom_call.1} parent=1 // pred_check
      _
    $region39: #{tpu_custom_call.1} parent=1 // pred_check_branch
      %250 = sbr.rel (0) target = $region41
    $region40: #{tpu_custom_call.1} parent=1 // pred_region
      %251 = dma.done [#allocation4], 128
    $region41: #{tpu_custom_call.1} parent=1 // pred_fallthru
      _
    %252 = vsyncpa [#allocation3], 1
    %253 = vsyncpa [#allocation6], 1
    %254 = vsyncpa [#allocation4], 1

</llo_original>
